<compile_context>
chip_gen: v6e
topology: v6e:2x2x1
jax: 0.10.0
libtpu: 0.0.40
codegen_flags: <defaults>
</compile_context>

<pallas_src>
import jax
import jax.numpy as jnp
from jax.experimental import pallas as pl
from jax.experimental.pallas import tpu as pltpu

LANES = 128
TARGET_BLOCK_BYTES = 4 * 1024 * 1024  # per-input block; x2 inputs x2 buffers ~= 16 MiB VMEM


def _make_kernel(row_tile, tiles_per_split, num_full_tiles, rows, has_edge):
    groups = row_tile // 8  # (row_tile,128) -> (groups, 8, 128) sublane groups

    def kernel(x_ref, t_ref, out_ref, acc_ref):
        s = pl.program_id(0)
        j = pl.program_id(1)

        # Reset the tiny (8,128) accumulator at the start of each split.
        @pl.when(j == 0)
        def _():
            acc_ref[...] = jnp.zeros_like(acc_ref)

        d = x_ref[...].astype(jnp.float32) - t_ref[...].astype(jnp.float32)
        # d * (2*sigmoid(d) - 1) == d * tanh(d/2): a single EUP op per element.
        term = d * jnp.tanh(0.5 * d)

        if has_edge:
            tile_idx = s * tiles_per_split + j

            # Hot path: fully-valid tiles, no mask work at runtime.
            @pl.when(tile_idx < num_full_tiles)
            def _():
                acc_ref[...] += term.reshape(groups, 8, LANES).sum(axis=0)

            # Cold path: the partial last tile and/or the duplicated overshoot
            # tile of the 2-way core split.  Mask by valid-row count (scalar,
            # stays far inside int32 range).
            @pl.when(tile_idx >= num_full_tiles)
            def _():
                valid_rows = rows - tile_idx * row_tile  # <= 0 for overshoot tile
                row_ids = jax.lax.broadcasted_iota(jnp.int32, (row_tile, LANES), 0)
                masked = jnp.where(row_ids < valid_rows, term, 0.0)
                acc_ref[...] += masked.reshape(groups, 8, LANES).sum(axis=0)
        else:
            acc_ref[...] += term.reshape(groups, 8, LANES).sum(axis=0)

        # One cross-lane/sublane reduction per split, on its last grid step.
        @pl.when(j == tiles_per_split - 1)
        def _():
            out_ref[0, 0] = jnp.sum(acc_ref[...])

    return kernel


def xsigmoid_loss(x, target):
    assert x.shape == target.shape, "input/target must match shapes"
    orig_dtype = x.dtype
    n = x.size

    flat_x = x.reshape(-1)
    flat_t = target.reshape(-1)

    itemsize = jnp.dtype(x.dtype).itemsize
    sub = max(8, 32 // itemsize)        # packed sublanes: 8 f32, 16 bf16, 32 int8/fp8
    align = sub * LANES
    aligned = (n // align) * align      # dtype-aligned prefix handled by the kernel

    total = jnp.zeros((), jnp.float32)

    if aligned > 0:
        rows = aligned // LANES         # multiple of `sub`
        if aligned == n:                # common case: zero-copy reshape
            x2 = flat_x.reshape(rows, LANES)
            t2 = flat_t.reshape(rows, LANES)
        else:
            x2 = flat_x[:aligned].reshape(rows, LANES)
            t2 = flat_t[:aligned].reshape(rows, LANES)

        # ~4 MiB per input block (8192 rows f32 / 16384 rows bf16), rounded to
        # the packed-sublane granularity.
        max_rows = max(sub, (TARGET_BLOCK_BYTES // (LANES * itemsize)) // sub * sub)
        row_tile = min(max_rows, rows)
        num_tiles = pl.cdiv(rows, row_tile)
        num_full_tiles = rows // row_tile

        # Always split tiles across two cores when there is more than one tile;
        # odd tile counts get one clamped overshoot tile (masked in-kernel).
        splits = 2 if num_tiles >= 2 else 1
        tiles_per_split = pl.cdiv(num_tiles, splits)
        total_grid_tiles = splits * tiles_per_split
        has_edge = total_grid_tiles > num_full_tiles

        if has_edge:
            def idx_map(s, j, _tps=tiles_per_split, _last=num_tiles - 1):
                return (jnp.minimum(s * _tps + j, _last), 0)
        else:
            def idx_map(s, j, _tps=tiles_per_split):
                return (s * _tps + j, 0)

        kernel = _make_kernel(row_tile, tiles_per_split, num_full_tiles, rows,
                              has_edge)

        cost = pl.CostEstimate(
            flops=4 * aligned,
            transcendentals=aligned,
            bytes_accessed=2 * aligned * itemsize + splits * 4,
        )

        partials = pl.pallas_call(
            kernel,
            out_shape=jax.ShapeDtypeStruct((splits, 1), jnp.float32),
            grid_spec=pltpu.PrefetchScalarGridSpec(
                num_scalar_prefetch=0,
                grid=(splits, tiles_per_split),
                in_specs=[
                    pl.BlockSpec((row_tile, LANES), idx_map),
                    pl.BlockSpec((row_tile, LANES), idx_map),
                ],
                out_specs=pl.BlockSpec((1, 1), lambda s, j: (s, 0),
                                       memory_space=pltpu.SMEM),
                scratch_shapes=[pltpu.VMEM((8, LANES), jnp.float32)],
            ),
            compiler_params=pltpu.CompilerParams(
                dimension_semantics=("parallel", "arbitrary"),
                vmem_limit_bytes=40 * 1024 * 1024,
            ),
            cost_estimate=cost,
        )(x2, t2)

        total = total + jnp.sum(partials)

    if aligned != n:
        # < `align` leftover elements: cheaper as a one-liner than padding /
        # copying both full inputs in HBM.
        d_tail = (flat_x[aligned:].astype(jnp.float32)
                  - flat_t[aligned:].astype(jnp.float32))
        total = total + jnp.sum(d_tail * jnp.tanh(0.5 * d_tail))

    return (total / jnp.float32(n)).astype(orig_dtype)


def xsigmoid_loss_ref(x, target):
    d = x.astype(jnp.float32) - target.astype(jnp.float32)
    return jnp.mean(d * (2.0 * jax.nn.sigmoid(d) - 1.0)).astype(x.dtype)


if __name__ == "__main__":
    key = jax.random.PRNGKey(0)
    k1, k2 = jax.random.split(key)
    shape = (2, 4, 16, 16)  # NCHW
    x = jax.random.normal(k1, shape, dtype=jnp.float32)
    t = jax.random.normal(k2, shape, dtype=jnp.float32)

    out = jax.block_until_ready(xsigmoid_loss(x, t))
    ref = jax.block_until_ready(xsigmoid_loss_ref(x, t))

    assert jnp.allclose(out, ref, rtol=1e-5, atol=1e-6), (out, ref)
    print("KERNEL_OK")
</pallas_src>

<mosaic_0001>
module attributes {stable_mosaic.version = 11 : i64} {
  func.func @kernel(%arg0: i32, %arg1: i32, %arg2: memref<16x128xf32, #tpu.memory_space<vmem>>, %arg3: memref<16x128xf32, #tpu.memory_space<vmem>>, %arg4: memref<1x1xf32, #tpu.memory_space<smem>>, %arg5: memref<8x128xf32, #tpu.memory_space<vmem>>) attributes {dimension_semantics = [#tpu.dimension_semantics<parallel>, #tpu.dimension_semantics<arbitrary>], iteration_bounds = array<i64: 1, 1>, scalar_prefetch = 0 : i64, scratch_operands = 1 : i64, tpu.core_type = #tpu.core_type<tc>, window_params = [{transform_indices = @transform_0, window_bounds = array<i64: 16, 128>}, {transform_indices = @transform_1, window_bounds = array<i64: 16, 128>}, {transform_indices = @transform_2, window_bounds = array<i64: 1, 1>}]} {
    %c0_i32 = arith.constant 0 : i32
    %0 = arith.cmpi eq, %arg1, %c0_i32 : i32
    %1 = arith.extui %0 : i1 to i32
    %c0_i32_0 = arith.constant 0 : i32
    %2 = arith.cmpi ne, %1, %c0_i32_0 : i32
    scf.if %2 {
      %cst_11 = arith.constant 0.000000e+00 : f32
      %18 = vector.broadcast %cst_11 : f32 to vector<8x128xf32>
      %c0_12 = arith.constant 0 : index
      %c0_13 = arith.constant 0 : index
      %19 = vector.load %arg5[%c0_12, %c0_13] : memref<8x128xf32, #tpu.memory_space<vmem>>, vector<8x128xf32>
      tpu.vector_store %arg5[%c0_12, %c0_13], %18 {strides = array<i32>} : memref<8x128xf32, #tpu.memory_space<vmem>>, vector<8x128xf32>,
    } else {
    }
    %c0 = arith.constant 0 : index
    %c0_1 = arith.constant 0 : index
    %3 = vector.load %arg2[%c0, %c0_1] : memref<16x128xf32, #tpu.memory_space<vmem>>, vector<16x128xf32>
    %c0_2 = arith.constant 0 : index
    %c0_3 = arith.constant 0 : index
    %4 = vector.load %arg3[%c0_2, %c0_3] : memref<16x128xf32, #tpu.memory_space<vmem>>, vector<16x128xf32>
    %5 = arith.subf %3, %4 : vector<16x128xf32>
    %cst = arith.constant 5.000000e-01 : f32
    %6 = vector.broadcast %cst : f32 to vector<16x128xf32>
    %7 = arith.mulf %6, %5 : vector<16x128xf32>
    %8 = math.tanh %7 : vector<16x128xf32>
    %9 = arith.mulf %5, %8 : vector<16x128xf32>
    %c0_4 = arith.constant 0 : index
    %c0_5 = arith.constant 0 : index
    %10 = vector.load %arg5[%c0_4, %c0_5] : memref<8x128xf32, #tpu.memory_space<vmem>>, vector<8x128xf32>
    %11 = vector.shape_cast %9 : vector<16x128xf32> to vector<2x8x128xf32>
    %cst_6 = arith.constant dense<0.000000e+00> : vector<8x128xf32>
    %12 = vector.multi_reduction <add>, %11, %cst_6 [0] : vector<2x8x128xf32> to vector<8x128xf32>
    %13 = arith.addf %10, %12 : vector<8x128xf32>
    %c0_7 = arith.constant 0 : index
    %c0_8 = arith.constant 0 : index
    %14 = vector.load %arg5[%c0_7, %c0_8] : memref<8x128xf32, #tpu.memory_space<vmem>>, vector<8x128xf32>
    tpu.vector_store %arg5[%c0_7, %c0_8], %13 {strides = array<i32>} : memref<8x128xf32, #tpu.memory_space<vmem>>, vector<8x128xf32>,
    %c0_i32_9 = arith.constant 0 : i32
    %15 = arith.cmpi eq, %arg1, %c0_i32_9 : i32
    %16 = arith.extui %15 : i1 to i32
    %c0_i32_10 = arith.constant 0 : i32
    %17 = arith.cmpi ne, %16, %c0_i32_10 : i32
    scf.if %17 {
      %c0_11 = arith.constant 0 : index
      %c0_12 = arith.constant 0 : index
      %18 = vector.load %arg5[%c0_11, %c0_12] : memref<8x128xf32, #tpu.memory_space<vmem>>, vector<8x128xf32>
      %19 = vector.shape_cast %18 : vector<8x128xf32> to vector<1x8x128xf32>
      %cst_13 = arith.constant dense<0.000000e+00> : vector<1xf32>
      %20 = vector.multi_reduction <add>, %19, %cst_13 [1, 2] : vector<1x8x128xf32> to vector<1xf32>
      %21 = vector.shape_cast %20 : vector<1xf32> to vector<1x1x1xf32>
      %22 = vector.extract %21[0, 0, 0] : f32 from vector<1x1x1xf32>
      %c0_14 = arith.constant 0 : index
      %c0_15 = arith.constant 0 : index
      %23 = memref.load %arg4[%c0_14, %c0_15] : memref<1x1xf32, #tpu.memory_space<smem>>
      memref.store %22, %arg4[%c0_14, %c0_15] : memref<1x1xf32, #tpu.memory_space<smem>>
    } else {
    }
    return
  }
  func.func @transform_0(%arg0: i32, %arg1: i32) -> (i32, i32) {
    %c1_i32 = arith.constant 1 : i32
    %0 = arith.muli %arg0, %c1_i32 : i32
    %1 = arith.addi %0, %arg1 : i32
    %c0_i32 = arith.constant 0 : i32
    %c0_i32_0 = arith.constant 0 : i32
    return %1, %c0_i32 : i32, i32
  }
  func.func @transform_1(%arg0: i32, %arg1: i32) -> (i32, i32) {
    %c1_i32 = arith.constant 1 : i32
    %0 = arith.muli %arg0, %c1_i32 : i32
    %1 = arith.addi %0, %arg1 : i32
    %c0_i32 = arith.constant 0 : i32
    %c0_i32_0 = arith.constant 0 : i32
    return %1, %c0_i32 : i32, i32
  }
  func.func @transform_2(%arg0: i32, %arg1: i32) -> (i32, i32) {
    %c0_i32 = arith.constant 0 : i32
    %c0_i32_0 = arith.constant 0 : i32
    return %arg0, %c0_i32 : i32, i32
  }
}

</mosaic_0001>

<llo_original>
// kernel: tpu_custom_call.1
$region0: #{tpu_custom_call.1}
  #allocation0 [shape = 'u32[]', space=smem, size = 0x4, offset = 0x4, fixed_abs, tag = 'smem constant byte address 0x4 - core index']
  #allocation1 [shape = 'u32[144,128]{1,0:T(1,128)}', space=vmem, size = 0x12000, scoped, tag = 'internal scratch']
  #allocation2 [shape = 'f32[8,128]{1,0:T(8,128)}', space=vmem, size = 0x1000, scoped, tag = 'scratch operand']
  %s0 = inlined_call_operand.hbm [shape: f32[16,128], index: 0, kind: input, shape index: {}]
  %s1 = inlined_call_operand.hbm [shape: f32[16,128], index: 1, kind: input, shape index: {}]
  %s2 = inlined_call_operand.hbm [shape: f32[1,1], index: 2, kind: output, shape index: {}]
  %s3 = sld [smem:[#allocation0]]
  $region34: #{tpu_custom_call.1} parent=0
    _
  %s5 = ssub.s32 1, %s3
  %s6 = scalar_select 0, %s5, %s3
  $region1: #{tpu_custom_call.1} parent=0
    #allocation3 [shape = 'u8[8192]{0}', space=vmem, size = 0x2000, scoped, tag = 'input window, operand 0, single buffered']
    #allocation4 [shape = 's32[1]{0}', space=sflag, size = 0x4, scoped, tag = 'scoped memory for tpu_custom_call.1']
    #allocation5 [shape = 's32[1]{0}', space=sflag, size = 0x4, scoped, tag = 'scoped memory for tpu_custom_call.1']
    #allocation6 [shape = 'u8[8192]{0}', space=vmem, size = 0x2000, scoped, tag = 'input window, operand 1, single buffered']
    #allocation7 [shape = 's32[1]{0}', space=sflag, size = 0x4, scoped, tag = 'scoped memory for tpu_custom_call.1']
    #allocation8 [shape = 'u8[512]{0}', space=smem, size = 0x200, scoped, tag = 'output window, operand 0, single buffered']
    %7 = vsyncpa [#allocation4], 0
    %8 = vsyncpa [#allocation7], 0
    %9 = vsyncpa [#allocation5], 0
    // Predicated region
    $region2: #{tpu_custom_call.1} parent=1 // pred_check
      _
    $region3: #{tpu_custom_call.1} parent=1 // pred_check_branch
      %11 = sbr.rel (0) target = $region5
    $region4: #{tpu_custom_call.1} parent=1 // pred_region
      %s12 = sadd.s32 0, 0
      %s13 = smul.u32 2, %s12
      %s15 = ssub.s32 256, 256
      %16 = vsyncadd [#allocation4], %s15
      %s17 = smul.addr %s13, 128
      %s18 = scalar_lea.hbm %s0, %s17
      %s19 = sshll.u32 [#allocation3], 4
      %s20 = int_to_ptr.vmem [resolvable:$true] %s19
      %25 = dma.hbm_to_vmem [thread:$0]  %s18, 256, %s20, [#allocation4], 128, 128, 8
    $region5: #{tpu_custom_call.1} parent=1 // pred_fallthru
      _
    // Predicated region
    $region6: #{tpu_custom_call.1} parent=1 // pred_check
      _
    $region7: #{tpu_custom_call.1} parent=1 // pred_check_branch
      %27 = sbr.rel (0) target = $region9
    $region8: #{tpu_custom_call.1} parent=1 // pred_region
      %s28 = sadd.s32 0, 0
      %s29 = smul.u32 2, %s28
      %s31 = ssub.s32 256, 256
      %32 = vsyncadd [#allocation7], %s31
      %s33 = smul.addr %s29, 128
      %s34 = scalar_lea.hbm %s1, %s33
      %s35 = sshll.u32 [#allocation6], 4
      %s36 = int_to_ptr.vmem [resolvable:$true] %s35
      %41 = dma.hbm_to_vmem [thread:$0]  %s34, 256, %s36, [#allocation7], 128, 128, 8
    $region9: #{tpu_custom_call.1} parent=1 // pred_fallthru
      _
    // Predicated region
    $region10: #{tpu_custom_call.1} parent=1 // pred_check
      _
    $region11: #{tpu_custom_call.1} parent=1 // pred_check_branch
      %43 = sbr.rel (0) target = $region13
    $region12: #{tpu_custom_call.1} parent=1 // pred_region
      %44 = dma.done [#allocation4], 256
    $region13: #{tpu_custom_call.1} parent=1 // pred_fallthru
      _
    // Predicated region
    $region14: #{tpu_custom_call.1} parent=1 // pred_check
      _
    $region15: #{tpu_custom_call.1} parent=1 // pred_check_branch
      %46 = sbr.rel (0) target = $region17
    $region16: #{tpu_custom_call.1} parent=1 // pred_region
      %47 = dma.done [#allocation7], 256
    $region17: #{tpu_custom_call.1} parent=1 // pred_fallthru
      _
    %s48 = sadd.s32 0, 0
    %s49 = smul.u32 2, %s48
    %s50 = sadd.s32 0, 0
    %s51 = smul.u32 2, %s50
    %p52 = scmp.eq.s32.totalorder 0, 0
    // Predicated region
    $region18: #{tpu_custom_call.1} parent=1 // pred_check
      %p53 = pneg %p52
    $region19: #{tpu_custom_call.1} parent=1 // pred_check_branch
      %55 = sbr.rel (%p53) target = $region21
    $region20: #{tpu_custom_call.1} parent=1 // pred_region
      %56 = vst [vmem:[#allocation2] sm:$0xff] 0.0
    $region21: #{tpu_custom_call.1} parent=1 // pred_fallthru
      _
    %v57 = vld [vmem:[#allocation3] sm:$0xff]
    %v58 = vld [vmem:[#allocation3 + $0x8] sm:$0xff]
    %v59 = vld [vmem:[#allocation6] sm:$0xff]
    %v60 = vld [vmem:[#allocation6 + $0x8] sm:$0xff]
    %v61 = vsub.f32 %v57, %v59
    %v62 = vsub.f32 %v58, %v60
    %v63 = vmul.f32 %v61, 0.5
    %v64 = vmul.f32 %v62, 0.5
    %v65 = vtanh.pop %v63
    %v66 = vtanh.pop %v64
    %v67 = vmul.f32 %v61, %v65
    %v68 = vmul.f32 %v62, %v66
    %v69 = vld [vmem:[#allocation2] sm:$0xff]
    %v70 = vadd.f32 %v67, %v68
    %v71 = vadd.f32 %v69, %v70
    %72 = vst [vmem:[#allocation2] sm:$0xff] %v71
    // Predicated region
    $region22: #{tpu_custom_call.1} parent=1 // pred_check
      %p73 = pneg %p52
    $region23: #{tpu_custom_call.1} parent=1 // pred_check_branch
      %75 = sbr.rel (%p73) target = $region25
    $region24: #{tpu_custom_call.1} parent=1 // pred_region
      %v76 = vld [vmem:[#allocation2] sm:$0xff]
      %77 = vadd.xlane.f32.xlu0 %v76
      %v78 = vpop.xlane.xlu0 %77
      %v79 = vrot.slane %v78, 4
      %v80 = vadd.f32 %v78, %v79
      %v81 = vrot.slane %v80, 2
      %v82 = vadd.f32 %v80, %v81
      %v83 = vrot.slane %v82, 1
      %v84 = vadd.f32 %v82, %v83
      %s85 = vtos %v84
      %s86 = scalar_lea.smem [#allocation8], 0
      %87 = sst [smem:[%s86]] %s85
    $region25: #{tpu_custom_call.1} parent=1 // pred_fallthru
      _
    // Predicated region
    $region26: #{tpu_custom_call.1} parent=1 // pred_check
      _
    $region27: #{tpu_custom_call.1} parent=1 // pred_check_branch
      %89 = sbr.rel (0) target = $region29
    $region28: #{tpu_custom_call.1} parent=1 // pred_region
      %s91 = ssub.s32 16, 16
      %92 = vsyncadd [#allocation5], %s91
      %95 = dma.smem_to_hbm [#allocation8], 16, %s2, [#allocation5]
    $region29: #{tpu_custom_call.1} parent=1 // pred_fallthru
      _
    // Predicated region
    $region30: #{tpu_custom_call.1} parent=1 // pred_check
      _
    $region31: #{tpu_custom_call.1} parent=1 // pred_check_branch
      %97 = sbr.rel (0) target = $region33
    $region32: #{tpu_custom_call.1} parent=1 // pred_region
      %98 = dma.done [#allocation5], 16
    $region33: #{tpu_custom_call.1} parent=1 // pred_fallthru
      _
    %99 = sfence
    %100 = vsyncpa [#allocation4], 1
    %101 = vsyncpa [#allocation7], 1
    %102 = vsyncpa [#allocation5], 1

</llo_original>
